<compile_context>
chip_gen: v7x
topology: tpu7x:2x2x1
jax: 0.10.0
libtpu: 0.0.40
codegen_flags: <defaults>
</compile_context>

<pallas_src>
import functools
import math

import jax
import jax.numpy as jnp
from jax.experimental import pallas as pl
from jax.experimental.pallas import tpu as pltpu


def _pick_tile(n, cap):
    """Largest tile t <= cap with n % t == 0 and t % 8 == 0 (falls back to full n)."""
    if n <= cap:
        return n
    for t in range(cap, 7, -1):
        if n % t == 0 and t % 8 == 0:
            return t
    return n


# ----------------------------- kernel 1: fused projections -----------------------------

def _proj_kernel(q_ref, w_ref, b_ref, out_ref):
    out_ref[...] = (jnp.dot(q_ref[...], w_ref[...],
                            preferred_element_type=jnp.float32) + b_ref[...])


def fused_projection(q_flat, w_cat, b_cat):
    M, E = q_flat.shape
    D = w_cat.shape[1]
    tm = _pick_tile(M, 256)
    return pl.pallas_call(
        _proj_kernel,
        out_shape=jax.ShapeDtypeStruct((M, D), jnp.float32),
        grid=(M // tm,),
        in_specs=[pl.BlockSpec((tm, E), lambda i: (i, 0)),
                  pl.BlockSpec((E, D), lambda i: (0, 0)),
                  pl.BlockSpec((1, D), lambda i: (0, 0))],
        out_specs=pl.BlockSpec((tm, D), lambda i: (i, 0)),
        compiler_params=pltpu.CompilerParams(dimension_semantics=("parallel",)),
    )(q_flat, w_cat, b_cat)


# ----------------------------- kernel 2: grid_sample + camera sum -----------------------------

def _sample_kernel(coord_ref, gate_ref, feat_ref, out_ref, *, H, W):
    cam = pl.program_id(2)

    @pl.when(cam == 0)
    def _():
        out_ref[...] = jnp.zeros_like(out_ref)

    feat = feat_ref[0, 0]                       # (C, HW) bf16
    coord = coord_ref[0, 0]                     # (tn, 2) f32
    gate = gate_ref[0]                          # (tn, 1) f32
    gx = coord[:, 0:1]
    gy = coord[:, 1:2]
    tn = gx.shape[0]
    HW = H * W

    # F.grid_sample semantics: bilinear, align_corners=False, padding_mode='zeros'
    ix = jnp.clip((gx + 1.0) * (0.5 * W) - 0.5, -2.0, W + 2.0)
    iy = jnp.clip((gy + 1.0) * (0.5 * H) - 0.5, -2.0, H + 2.0)
    x0 = jnp.floor(ix)
    y0 = jnp.floor(iy)
    fx = ix - x0
    fy = iy - y0
    x0i = x0.astype(jnp.int32)
    y0i = y0.astype(jnp.int32)

    lane = jax.lax.broadcasted_iota(jnp.int32, (tn, HW), 1)
    acc = jnp.zeros((tn, HW), jnp.float32)
    for dy in (0, 1):
        for dx in (0, 1):
            xx = x0i + dx
            yy = y0i + dy
            wx = fx if dx else (1.0 - fx)
            wy = fy if dy else (1.0 - fy)
            valid = (xx >= 0) & (xx < W) & (yy >= 0) & (yy < H)
            w = wx * wy * jnp.where(valid, gate, 0.0)       # camera gate folded into weight
            onehot = (lane == (yy * W + xx)).astype(jnp.float32)
            acc = acc + w * onehot

    # contract over HW with the (C, HW) feature tile -> (tn, C); bf16 inputs, f32 accumulation
    sampled = jax.lax.dot_general(
        acc.astype(jnp.bfloat16), feat,
        dimension_numbers=(((1,), (1,)), ((), ())),
        preferred_element_type=jnp.float32)
    out_ref[0] += sampled


def grid_sample_sum_cams(coords, gate_s, feat_r, H, W, *, tile_cap=256):
    # coords: (bs, cams, N, 2) f32 ; gate_s: (cams, N, 1) f32 ; feat_r: (bs, cams, C, H*W) bf16
    bs, cams, N, _ = coords.shape
    C = feat_r.shape[2]
    tn = _pick_tile(N, tile_cap)
    kernel = functools.partial(_sample_kernel, H=H, W=W)
    return pl.pallas_call(
        kernel,
        out_shape=jax.ShapeDtypeStruct((bs, N, C), jnp.float32),
        grid=(bs, N // tn, cams),
        in_specs=[pl.BlockSpec((1, 1, tn, 2), lambda b, t, c: (b, c, t, 0)),
                  pl.BlockSpec((1, tn, 1), lambda b, t, c: (c, t, 0)),
                  pl.BlockSpec((1, 1, C, H * W), lambda b, t, c: (b, c, 0, 0))],
        out_specs=pl.BlockSpec((1, tn, C), lambda b, t, c: (b, t, 0)),
        compiler_params=pltpu.CompilerParams(
            dimension_semantics=("parallel", "parallel", "arbitrary")),
    )(coords, gate_s, feat_r)


# ----------------------------- kernel 3: weighted reduce + output proj -----------------------------

def _out_kernel(slots_ref, attn_ref, count_ref, resid_ref, w_ref, b_ref, out_ref):
    # torch.nan_to_num defaults: nan->0, +inf->f32.max, -inf->f32.min
    slots = slots_ref[...]                                    # (tm, K, C), lane-dense C
    finfo = jnp.finfo(jnp.float32)
    slots = jnp.where(jnp.isnan(slots), 0.0, slots)
    slots = jnp.clip(slots, finfo.min, finfo.max)
    attn = attn_ref[...]                                      # (tm, K)
    weighted = jnp.sum(slots * attn[:, :, None], axis=1)      # (tm, C)
    weighted = weighted * pl.reciprocal(count_ref[...], approx=True)
    y = jnp.dot(weighted, w_ref[...], preferred_element_type=jnp.float32) + b_ref[...]
    out_ref[...] = y + resid_ref[...]                         # dropout(eval) = identity


def output_stage(slots, attn, count, resid, w_out, b_out):
    M, K, C = slots.shape
    tm = _pick_tile(M, 256)
    return pl.pallas_call(
        _out_kernel,
        out_shape=jax.ShapeDtypeStruct((M, C), jnp.float32),
        grid=(M // tm,),
        in_specs=[pl.BlockSpec((tm, K, C), lambda i: (i, 0, 0)),
                  pl.BlockSpec((tm, K), lambda i: (i, 0)),
                  pl.BlockSpec((tm, 1), lambda i: (i, 0)),
                  pl.BlockSpec((tm, C), lambda i: (i, 0)),
                  pl.BlockSpec((C, C), lambda i: (0, 0)),
                  pl.BlockSpec((1, C), lambda i: (0, 0))],
        out_specs=pl.BlockSpec((tm, C), lambda i: (i, 0)),
        compiler_params=pltpu.CompilerParams(dimension_semantics=("parallel",)),
    )(slots, attn, count, resid, w_out, b_out)


# ----------------------------- module forward -----------------------------

def detr3d_cross_atten(params, query, mlvl_feats, reference_points, lidar2img,
                       query_pos=None):
    cfg = params['cfg']
    Hh = cfg['num_heads']
    L = cfg['num_levels']
    Pil = cfg['num_points_in_pillar']
    Pp = cfg['num_points']
    PP = Pil * Pp
    pc_range = cfg['pc_range']
    img_h, img_w = cfg['img_h'], cfg['img_w']

    bs, num_query, C_e = query.shape
    num_cams = lidar2img.shape[1]
    M = bs * num_query

    inp_residual = query
    q_in = query + query_pos if query_pos is not None else query

    # --- fused sampling_offsets + attention_weights linears (Pallas kernel 1) ---
    D_off = Hh * L * PP * 2
    proj = fused_projection(q_in.reshape(M, C_e).astype(jnp.float32),
                            params['w_cat'], params['b_cat'])
    off_raw = proj[:, :D_off]
    # attention flat layout (head, point, level) already matches slots flatten(-2) pairing
    attn_flat = proj[:, D_off:]                                                # (M, Hh*PP*L)
    offsets = off_raw.reshape(bs, num_query, Hh, L, Pil, Pp, 2)

    # --- reference point projection (glue; tiny 4x4 matmuls, stays in XLA) ---
    rp = jnp.transpose(reference_points, (0, 2, 3, 1, 4)).reshape(bs, num_query, Pil, 3)
    rp = jnp.stack([
        rp[..., 0] * (pc_range[3] - pc_range[0]) + pc_range[0],
        rp[..., 1] * (pc_range[4] - pc_range[1]) + pc_range[1],
        rp[..., 2] * (pc_range[5] - pc_range[2]) + pc_range[2],
    ], axis=-1)
    rp_h = jnp.concatenate([rp, jnp.ones_like(rp[..., :1])], axis=-1)          # (bs,q,Pil,4)
    rp_cam = jnp.einsum('bnij,bqpj->bnqpi', lidar2img, rp_h)                   # (bs,cam,q,Pil,4)

    eps = 1e-5
    z = rp_cam[..., 2:3]
    mask = z > eps
    xy = rp_cam[..., 0:2] / jnp.maximum(z, eps)
    xy = xy / jnp.array([img_w, img_h], jnp.float32)
    xy = (xy - 0.5) * 2.0                                                      # (bs,cam,q,Pil,2)
    mask = (mask & (xy[..., 0:1] > -1.0) & (xy[..., 0:1] < 1.0)
                 & (xy[..., 1:2] > -1.0) & (xy[..., 1:2] < 1.0))[..., 0]       # (bs,cam,q,Pil)

    # per-camera query gate from the batch-0 mask (matches original rebatching exactly)
    gate = (jnp.sum(mask[0], axis=-1) > 0).astype(jnp.float32)                 # (cam, q)
    count = jnp.sum((jnp.sum(mask, axis=-1) > 0).astype(jnp.float32), axis=1)  # (bs, q)
    count = jnp.maximum(count, 1.0)

    N = num_query * Hh * PP
    gate_s = jnp.broadcast_to(gate[:, :, None],
                              (num_cams, num_query, Hh * PP)).reshape(num_cams, N, 1)
    rp_b = xy[:, :, :, None, :, None, :]                                       # (bs,cam,q,1,Pil,1,2)

    # --- bilinear sampling + camera-gated sum per level (Pallas kernel 2) ---
    slots_levels = []
    C_feat = None
    for lvl, feat in enumerate(mlvl_feats):
        _, _, C_feat, Hf, Wf = feat.shape
        off_l = offsets[:, None, :, :, lvl]                                    # (bs,1,q,Hh,Pil,Pp,2)
        coords = (rp_b + off_l).reshape(bs, num_cams, N, 2)
        feat_r = feat.reshape(bs, num_cams, C_feat, Hf * Wf).astype(jnp.bfloat16)
        slots_levels.append(grid_sample_sum_cams(coords, gate_s, feat_r, Hf, Wf))  # (bs,N,C)

    # slots (M, K, C) with K ordered (head, point, level) and C lane-dense
    slots = jnp.stack(slots_levels, axis=2).reshape(M, Hh * PP * L, C_feat)
    count_flat = count.reshape(M, 1)
    resid_flat = inp_residual.reshape(M, C_e).astype(jnp.float32)

    # --- nan_to_num + weighted reduction + /count + output_proj + residual (Pallas kernel 3) ---
    out = output_stage(slots, attn_flat, count_flat, resid_flat,
                       params['w_out'], params['b_out'])
    return out.reshape(bs, num_query, C_e)


# ----------------------------- parameter init -----------------------------

def init_params(key, embed_dims, num_heads, num_levels, num_points_in_pillar,
                num_points, pc_range, img_h, img_w):
    PP = num_points_in_pillar * num_points
    k1, k2, k3, k4 = jax.random.split(key, 4)

    # structured sampling_offsets bias as in init_weight() (scaled to keep samples on-grid)
    thetas = jnp.arange(num_heads, dtype=jnp.float32) * (2.0 * math.pi / num_heads)
    grid_init = jnp.stack([jnp.cos(thetas), jnp.sin(thetas)], axis=-1)          # (H, 2)
    grid_init = grid_init / jnp.max(jnp.abs(grid_init), axis=-1, keepdims=True)
    grid_init = jnp.tile(grid_init[:, None, None, :], (1, num_levels, PP, 1))   # (H, L, PP, 2)
    grid_init = grid_init * (jnp.arange(PP, dtype=jnp.float32) + 1.0)[None, None, :, None]
    b_off = (0.05 * grid_init).reshape(-1)

    w_off = 0.02 * jax.random.normal(k1, (embed_dims, num_heads * num_levels * PP * 2), jnp.float32)
    w_attn = 0.1 * jax.random.normal(k2, (embed_dims, num_heads * num_levels * PP), jnp.float32)
    b_attn = 0.1 * jax.random.normal(k3, (num_heads * num_levels * PP,), jnp.float32)
    # fused projection weight / bias (offsets columns first, attention columns second)
    w_cat = jnp.concatenate([w_off, w_attn], axis=1)
    b_cat = jnp.concatenate([b_off, b_attn])[None, :]

    lim = math.sqrt(6.0 / (embed_dims + embed_dims))
    w_out = jax.random.uniform(k4, (embed_dims, embed_dims), jnp.float32, -lim, lim)
    b_out = jnp.zeros((1, embed_dims), jnp.float32)

    cfg = dict(num_heads=num_heads, num_levels=num_levels,
               num_points_in_pillar=num_points_in_pillar, num_points=num_points,
               pc_range=pc_range, img_h=img_h, img_w=img_w)
    return dict(cfg=cfg, w_cat=w_cat, b_cat=b_cat, w_out=w_out, b_out=b_out)


# ----------------------------- demo / main -----------------------------

if __name__ == "__main__":
    key = jax.random.PRNGKey(0)

    bs = 2
    embed_dims = 32
    num_heads = 4
    num_levels = 2
    num_points_in_pillar = 2
    num_points = 2
    num_cams = 2
    h_bev, w_bev = 4, 4
    num_query = h_bev * w_bev
    img_h, img_w = 64.0, 64.0
    pc_range = (-10.0, -10.0, -2.0, 10.0, 10.0, 2.0)
    feat_shapes = [(16, 16), (8, 8)]

    keys = jax.random.split(key, 3 + num_levels)
    params = init_params(keys[0], embed_dims, num_heads, num_levels,
                         num_points_in_pillar, num_points, pc_range, img_h, img_w)

    query = jax.random.normal(keys[1], (bs, num_query, embed_dims), jnp.float32)
    query_pos = 0.1 * jax.random.normal(keys[2], (bs, num_query, embed_dims), jnp.float32)
    mlvl_feats = [
        jax.random.normal(keys[3 + i], (bs, num_cams, embed_dims, Hf, Wf), jnp.float32)
        for i, (Hf, Wf) in enumerate(feat_shapes)
    ]

    # normalized reference points in [0, 1]: (bs, n_pillar, h_bev, w_bev, 3)
    xs = (jnp.arange(w_bev, dtype=jnp.float32) + 0.5) / w_bev
    ys = (jnp.arange(h_bev, dtype=jnp.float32) + 0.5) / h_bev
    zs = (jnp.arange(num_points_in_pillar, dtype=jnp.float32) + 0.5) / num_points_in_pillar
    zz, yy, xx = jnp.meshgrid(zs, ys, xs, indexing='ij')
    ref = jnp.stack([xx, yy, zz], axis=-1)
    reference_points = jnp.broadcast_to(
        ref[None], (bs, num_points_in_pillar, h_bev, w_bev, 3))

    # deterministic pinhole-like lidar2img matrices (cameras rotated about z)
    mats = []
    for cam in range(num_cams):
        th = 2.0 * math.pi * cam / num_cams
        rot = jnp.array([[math.cos(th), -math.sin(th), 0.0, 0.0],
                         [math.sin(th),  math.cos(th), 0.0, 0.0],
                         [0.0, 0.0, 1.0, 0.0],
                         [0.0, 0.0, 0.0, 1.0]], jnp.float32)
        axes = jnp.array([[0.0, -1.0, 0.0, 0.0],
                          [0.0, 0.0, -1.0, 0.0],
                          [1.0, 0.0, 0.0, 0.0],
                          [0.0, 0.0, 0.0, 1.0]], jnp.float32)
        Kmat = jnp.array([[20.0, 0.0, img_w / 2, 0.0],
                          [0.0, 20.0, img_h / 2, 0.0],
                          [0.0, 0.0, 1.0, 0.0],
                          [0.0, 0.0, 0.0, 1.0]], jnp.float32)
        mats.append(Kmat @ axes @ rot)
    lidar2img = jnp.broadcast_to(jnp.stack(mats)[None], (bs, num_cams, 4, 4))

    out = detr3d_cross_atten(params, query, mlvl_feats, reference_points, lidar2img,
                             query_pos=query_pos)
    out = jax.block_until_ready(out)
    assert out.shape == (bs, num_query, embed_dims)
    assert bool(jnp.all(jnp.isfinite(out)))
    print("KERNEL_OK")
</pallas_src>

<mosaic_0001>
module attributes {stable_mosaic.version = 11 : i64} {
  func.func @_proj_kernel(%arg0: i32, %arg1: memref<32x32xf32, #tpu.memory_space<vmem>>, %arg2: memref<32x96xf32, #tpu.memory_space<vmem>>, %arg3: memref<1x96xf32, #tpu.memory_space<vmem>>, %arg4: memref<32x96xf32, #tpu.memory_space<vmem>>) attributes {dimension_semantics = [#tpu.dimension_semantics<parallel>], iteration_bounds = array<i64: 1>, scalar_prefetch = 0 : i64, scratch_operands = 0 : i64, tpu.core_type = #tpu.core_type<tc>, window_params = [{transform_indices = @transform_0, window_bounds = array<i64: 32, 32>}, {pipeline_mode = #tpu.pipeline_mode<synchronous>, transform_indices = @transform_1, window_bounds = array<i64: 32, 96>}, {pipeline_mode = #tpu.pipeline_mode<synchronous>, transform_indices = @transform_2, window_bounds = array<i64: 1, 96>}, {transform_indices = @transform_3, window_bounds = array<i64: 32, 96>}]} {
    %c0 = arith.constant 0 : index
    %c0_0 = arith.constant 0 : index
    %0 = vector.load %arg1[%c0, %c0_0] : memref<32x32xf32, #tpu.memory_space<vmem>>, vector<32x32xf32>
    %c0_1 = arith.constant 0 : index
    %c0_2 = arith.constant 0 : index
    %1 = vector.load %arg2[%c0_1, %c0_2] : memref<32x96xf32, #tpu.memory_space<vmem>>, vector<32x96xf32>
    %cst = arith.constant dense<0.000000e+00> : vector<32x96xf32>
    %2 = tpu.matmul %0, %1, %cst {dimension_numbers = #tpu.dot_dimension_numbers<[1], [0], [0], [1], [0, 0, 1, 1], [], []>} : vector<32x32xf32>, vector<32x96xf32>, vector<32x96xf32> -> vector<32x96xf32>
    %c0_3 = arith.constant 0 : index
    %c0_4 = arith.constant 0 : index
    %3 = vector.load %arg3[%c0_3, %c0_4] : memref<1x96xf32, #tpu.memory_space<vmem>>, vector<1x96xf32>
    %4 = vector.broadcast %3 : vector<1x96xf32> to vector<32x96xf32>
    %5 = arith.addf %2, %4 : vector<32x96xf32>
    %c0_5 = arith.constant 0 : index
    %c0_6 = arith.constant 0 : index
    %6 = vector.load %arg4[%c0_5, %c0_6] : memref<32x96xf32, #tpu.memory_space<vmem>>, vector<32x96xf32>
    tpu.vector_store %arg4[%c0_5, %c0_6], %5 {strides = array<i32>} : memref<32x96xf32, #tpu.memory_space<vmem>>, vector<32x96xf32>,
    return
  }
  func.func @transform_0(%arg0: i32) -> (i32, i32) {
    %c0_i32 = arith.constant 0 : i32
    %c0_i32_0 = arith.constant 0 : i32
    return %arg0, %c0_i32 : i32, i32
  }
  func.func @transform_1(%arg0: i32) -> (i32, i32) {
    %c0_i32 = arith.constant 0 : i32
    %c0_i32_0 = arith.constant 0 : i32
    %c0_i32_1 = arith.constant 0 : i32
    return %c0_i32, %c0_i32_0 : i32, i32
  }
  func.func @transform_2(%arg0: i32) -> (i32, i32) {
    %c0_i32 = arith.constant 0 : i32
    %c0_i32_0 = arith.constant 0 : i32
    %c0_i32_1 = arith.constant 0 : i32
    return %c0_i32, %c0_i32_0 : i32, i32
  }
  func.func @transform_3(%arg0: i32) -> (i32, i32) {
    %c0_i32 = arith.constant 0 : i32
    %c0_i32_0 = arith.constant 0 : i32
    return %arg0, %c0_i32 : i32, i32
  }
}

</mosaic_0001>

<llo_original>
// kernel: tpu_custom_call.1
$region0: #{tpu_custom_call.1}
  #allocation0 [shape = 'u32[]', space=smem, size = 0x4, offset = 0x4, fixed_abs, tag = 'smem constant byte address 0x4 - core index']
  #allocation1 [shape = 'u32[144,128]{1,0:T(1,128)}', space=vmem, size = 0x12000, scoped, tag = 'internal scratch']
  %s0 = inlined_call_operand.hbm [shape: f32[32,32], index: 0, kind: input, shape index: {}]
  %s1 = inlined_call_operand.hbm [shape: f32[32,96], index: 1, kind: input, shape index: {}]
  %s2 = inlined_call_operand.vmem [shape: f32[1,96], index: 2, kind: input, shape index: {}]
  %s3 = inlined_call_operand.hbm [shape: f32[32,96], index: 3, kind: output, shape index: {}]
  %s4 = sld [smem:[#allocation0]]
  $region30: #{tpu_custom_call.1} parent=0
    _
  %s6 = ssub.s32 1, %s4
  %s7 = scalar_select 0, %s6, %s4
  $region1: #{tpu_custom_call.1} parent=0
    #allocation2 [shape = 'u8[16384]{0}', space=vmem, size = 0x4000, scoped, tag = 'input window, operand 0, single buffered']
    #allocation3 [shape = 's32[1]{0}', space=sflag, size = 0x4, scoped, tag = 'scoped memory for tpu_custom_call.1']
    #allocation4 [shape = 's32[1]{0}', space=sflag, size = 0x4, scoped, tag = 'scoped memory for tpu_custom_call.1']
    #allocation5 [shape = 'u8[16384]{0}', space=vmem, size = 0x4000, scoped, tag = 'input window, operand 1, single buffered']
    #allocation6 [shape = 's32[1]{0}', space=sflag, size = 0x4, scoped, tag = 'scoped memory for tpu_custom_call.1']
    #allocation7 [shape = 'u8[16384]{0}', space=vmem, size = 0x4000, scoped, tag = 'output window, operand 0, single buffered']
    %8 = vsyncpa [#allocation3], 0
    %9 = vsyncpa [#allocation6], 0
    %10 = vsyncpa [#allocation4], 0
    // Predicated region
    $region2: #{tpu_custom_call.1} parent=1 // pred_check
      _
    $region3: #{tpu_custom_call.1} parent=1 // pred_check_branch
      %12 = sbr.rel (0) target = $region5
    $region4: #{tpu_custom_call.1} parent=1 // pred_region
      %s14 = ssub.s32 512, 512
      %15 = vsyncadd [#allocation3], %s14
      %s16 = sshll.u32 [#allocation2], 4
      %s17 = int_to_ptr.vmem [resolvable:$true] %s16
      %22 = dma.hbm_to_vmem [thread:$0]  %s0, 512, %s17, [#allocation3], 128, 128, 8
    $region5: #{tpu_custom_call.1} parent=1 // pred_fallthru
      _
    // Predicated region
    $region6: #{tpu_custom_call.1} parent=1 // pred_check
      _
    $region7: #{tpu_custom_call.1} parent=1 // pred_check_branch
      %24 = sbr.rel (0) target = $region9
    $region8: #{tpu_custom_call.1} parent=1 // pred_region
      %s26 = ssub.s32 512, 512
      %27 = vsyncadd [#allocation6], %s26
      %s28 = sshll.u32 [#allocation5], 4
      %s29 = int_to_ptr.vmem [resolvable:$true] %s28
      %34 = dma.hbm_to_vmem [thread:$0]  %s1, 512, %s29, [#allocation6], 128, 128, 8
    $region9: #{tpu_custom_call.1} parent=1 // pred_fallthru
      _
    // Predicated region
    $region10: #{tpu_custom_call.1} parent=1 // pred_check
      _
    $region11: #{tpu_custom_call.1} parent=1 // pred_check_branch
      %36 = sbr.rel (0) target = $region13
    $region12: #{tpu_custom_call.1} parent=1 // pred_region
      _
    $region13: #{tpu_custom_call.1} parent=1 // pred_fallthru
      _
    // Predicated region
    $region14: #{tpu_custom_call.1} parent=1 // pred_check
      _
    $region15: #{tpu_custom_call.1} parent=1 // pred_check_branch
      %38 = sbr.rel (0) target = $region17
    $region16: #{tpu_custom_call.1} parent=1 // pred_region
      %39 = dma.done [#allocation3], 512
    $region17: #{tpu_custom_call.1} parent=1 // pred_fallthru
      _
    // Predicated region
    $region18: #{tpu_custom_call.1} parent=1 // pred_check
      _
    $region19: #{tpu_custom_call.1} parent=1 // pred_check_branch
      %41 = sbr.rel (0) target = $region21
    $region20: #{tpu_custom_call.1} parent=1 // pred_region
      %42 = dma.done [#allocation6], 512
    $region21: #{tpu_custom_call.1} parent=1 // pred_fallthru
      _
    %v43 = vld [vmem:[#allocation2] sm:$0xff]
    %v44 = vld [vmem:[#allocation2 + $0x8] sm:$0xff]
    %v45 = vld [vmem:[#allocation2 + $0x10] sm:$0xff]
    %v46 = vld [vmem:[#allocation2 + $0x18] sm:$0xff]
    %v47 = vld [vmem:[#allocation5] sm:$0xff]
    %v48 = vld [vmem:[#allocation5 + $0x8] sm:$0xff]
    %v49 = vld [vmem:[#allocation5 + $0x10] sm:$0xff]
    %v50 = vld [vmem:[#allocation5 + $0x18] sm:$0xff]
    %v51 = vld [vmem:[%s2] sm:$0x1]
    %v53 = vlaneseq
    %v54 = vshrl.u32 %v53, 7
    %v55 = vsub.s32 0, %v54
    %v56 = vrot.slane %v51, %v55
    %vm58 = vcmask 261120
    %v60 = vsel %vm58, %v43, 0
    %v63 = vsel %vm58, %v44, 0
    %v66 = vsel %vm58, %v45, 0
    %v69 = vsel %vm58, %v46, 0
    %71 = vmatprep.subr.mxu0 0.0
    %72 = vmatpush1.msra.mxu0 %v47
    %73 = vmatprep.subr.mxu0 0.0
    %74 = vmatpush1.msra.mxu0 %v48
    %75 = vmatprep.subr.mxu0 0.0
    %76 = vmatpush1.msra.mxu0 %v49
    %77 = vmatprep.subr.mxu0 0.0
    %78 = vmatpush1.msra.mxu0 %v50
    %79 = vmatprep.subr.mxu0 0.0
    %80 = vmatpush1.msra.mxu0 0.0
    %81 = vmatprep.subr.mxu0 0.0
    %82 = vmatpush1.msra.mxu0 0.0
    %83 = vmatprep.subr.mxu0 0.0
    %84 = vmatpush1.msra.mxu0 0.0
    %85 = vmatprep.subr.mxu0 0.0
    %86 = vmatpush1.msra.mxu0 0.0
    %87 = vmatprep.subr.mxu0 0.0
    %88 = vmatpush1.msra.mxu0 0.0
    %89 = vmatprep.subr.mxu0 0.0
    %90 = vmatpush1.msra.mxu0 0.0
    %91 = vmatprep.subr.mxu0 0.0
    %92 = vmatpush1.msra.mxu0 0.0
    %93 = vmatprep.subr.mxu0 0.0
    %94 = vmatpush1.msra.mxu0 0.0
    %95 = vmatprep.subr.mxu0 0.0
    %96 = vmatpush1.msra.mxu0 0.0
    %97 = vmatprep.subr.mxu0 0.0
    %98 = vmatpush1.msra.mxu0 0.0
    %99 = vmatprep.subr.mxu0 0.0
    %100 = vmatpush1.msra.mxu0 0.0
    %101 = vmatprep.subr.mxu0 0.0
    %102 = vmatpush1.msra.mxu0 0.0
    %103 = vmatprep.subr.mxu0 0.0
    %104 = vmatpush1.msra.mxu0 0.0
    %105 = vmatprep.subr.mxu0 0.0
    %106 = vmatpush1.msra.mxu0 0.0
    %107 = vmatprep.subr.mxu0 0.0
    %108 = vmatpush1.msra.mxu0 0.0
    %109 = vmatprep.subr.mxu0 0.0
    %110 = vmatpush1.msra.mxu0 0.0
    %111 = vmatprep.subr.mxu0 0.0
    %112 = vmatpush1.msra.mxu0 0.0
    %113 = vmatprep.subr.mxu0 0.0
    %114 = vmatpush1.msra.mxu0 0.0
    %115 = vmatprep.subr.mxu0 0.0
    %116 = vmatpush1.msra.mxu0 0.0
    %117 = vmatprep.subr.mxu0 0.0
    %118 = vmatpush1.msra.mxu0 0.0
    %119 = vmatprep.subr.mxu0 0.0
    %120 = vmatpush1.msra.mxu0 0.0
    %121 = vmatprep.subr.mxu0 0.0
    %122 = vmatpush1.msra.mxu0 0.0
    %123 = vmatprep.subr.mxu0 0.0
    %124 = vmatpush1.msra.mxu0 0.0
    %125 = vmatprep.subr.mxu0 0.0
    %126 = vmatpush1.msra.mxu0 0.0
    %127 = vmatprep.subr.mxu0 0.0
    %128 = vmatpush1.msra.mxu0 0.0
    %129 = vmatprep.subr.mxu0 0.0
    %130 = vmatpush1.msra.mxu0 0.0
    %131 = vmatprep.subr.mxu0 0.0
    %132 = vmatpush1.msra.mxu0 0.0
    %133 = vmatprep.subr.mxu0 0.0
    %134 = vmatpush1.msra.mxu0 0.0
    %135 = vmatprep.mubr.f32.mxu0 0.0
    %136 = vmatmul.mubr.f32.gmra.mrb[0].mxu0 %v60
    %v137 = vpop.f32.mrb[0].mxu0
    %v138 = vadd.f32 %v56, %v137
    %v139 = vpop.f32.mrb[0].mxu0
    %140 = vmatprep.mubr.f32.mxu0 0.0
    %141 = vmatmul.mubr.f32.gmra.mrb[0].mxu0 %v63
    %v142 = vpop.f32.mrb[0].mxu0
    %v143 = vadd.f32 %v56, %v142
    %v144 = vpop.f32.mrb[0].mxu0
    %145 = vmatprep.mubr.f32.mxu0 0.0
    %146 = vmatmul.mubr.f32.gmra.mrb[0].mxu0 %v66
    %v147 = vpop.f32.mrb[0].mxu0
    %v148 = vadd.f32 %v56, %v147
    %v149 = vpop.f32.mrb[0].mxu0
    %150 = vmatprep.mubr.f32.mxu0 0.0
    %151 = vmatmul.mubr.f32.gmra.mrb[0].mxu0 %v69
    %v152 = vpop.f32.mrb[0].mxu0
    %v153 = vadd.f32 %v56, %v152
    %v154 = vpop.f32.mrb[0].mxu0
    %155 = vdwg.mxu0
    %vm156 = vcmask 785408
    %157 = vst.msk [vmem:[#allocation7] sm:$0xff] %vm156, %v138
    %158 = vst.msk [vmem:[#allocation7 + $0x8] sm:$0xff] %vm156, %v143
    %159 = vst.msk [vmem:[#allocation7 + $0x10] sm:$0xff] %vm156, %v148
    %160 = vst.msk [vmem:[#allocation7 + $0x18] sm:$0xff] %vm156, %v153
    // Predicated region
    $region22: #{tpu_custom_call.1} parent=1 // pred_check
      _
    $region23: #{tpu_custom_call.1} parent=1 // pred_check_branch
      %162 = sbr.rel (0) target = $region25
    $region24: #{tpu_custom_call.1} parent=1 // pred_region
      %s164 = ssub.s32 512, 512
      %165 = vsyncadd [#allocation4], %s164
      %s166 = sshll.u32 [#allocation7], 4
      %s167 = int_to_ptr.vmem [resolvable:$true] %s166
      %172 = dma.vmem_to_hbm [thread:$0]  %s167, 512, %s3, [#allocation4], 128, 128, 8
    $region25: #{tpu_custom_call.1} parent=1 // pred_fallthru
      _
    // Predicated region
    $region26: #{tpu_custom_call.1} parent=1 // pred_check
      _
    $region27: #{tpu_custom_call.1} parent=1 // pred_check_branch
      %174 = sbr.rel (0) target = $region29
    $region28: #{tpu_custom_call.1} parent=1 // pred_region
      %175 = dma.done [#allocation4], 512
    $region29: #{tpu_custom_call.1} parent=1 // pred_fallthru
      _
    %176 = vsyncpa [#allocation3], 1
    %177 = vsyncpa [#allocation6], 1
    %178 = vsyncpa [#allocation4], 1

</llo_original>
